<compile_context>
chip_gen: v5e
topology: v5e:2x2
jax: 0.10.0
libtpu: 0.0.40
codegen_flags: <defaults>
</compile_context>

<pallas_src>
import jax
import jax.numpy as jnp
from jax.experimental import pallas as pl
from jax.experimental.pallas import tpu as pltpu


_LANE = 128   # vreg lane width
_SUB = 8      # vreg sublane count
_TILE_ROWS_MAX = 2048  # 2048 * 128 * 4B = 1 MiB per f32 input tile per buffer


def _make_partial_kernel(tile_rows, total_rows, needs_mask):
    """Per-tile squared-error partial sums, reduced to one (8, 128) vreg."""

    def kernel(pred_ref, tgt_ref, out_ref):
        d = pred_ref[...].astype(jnp.float32) - tgt_ref[...].astype(jnp.float32)
        dd = d * d
        if needs_mask:
            # Last (partial) row-tile: zero rows past the true row count.
            row0 = pl.program_id(0) * tile_rows
            ridx = row0 + jax.lax.broadcasted_iota(jnp.int32, dd.shape, 0)
            dd = jnp.where(ridx < total_rows, dd, jnp.float32(0.0))
        # Fold the tile's sublane groups on the VPU: (tile_rows, 128) ->
        # (tile_rows//8, 8, 128) -> sum over leading axis -> one (8, 128) vreg.
        out_ref[...] = dd.reshape(tile_rows // _SUB, _SUB, _LANE).sum(axis=0)

    return kernel


def _validate_inputs(predictions, targets):
    # Mirrors LossFunction.validate_inputs semantics (type + shape checks).
    if not isinstance(predictions, jax.Array):
        raise ValueError("Predictions must be a jax.Array")
    if not isinstance(targets, jax.Array):
        raise ValueError("Targets must be a jax.Array")
    if predictions.shape != targets.shape:
        raise ValueError("Predictions and targets must have the same shape")


def loss_forward(predictions, targets, parameters=None):
    """MSE loss = mean((predictions - targets)^2), computed in a Pallas kernel."""
    _validate_inputs(predictions, targets)

    n_elem = predictions.size
    p_flat = jnp.ravel(predictions)   # metadata-only for contiguous inputs
    t_flat = jnp.ravel(targets)

    chunk = _LANE * _SUB              # 1024-element granularity for the kernel
    main = (n_elem // chunk) * chunk  # portion handled by the Pallas kernel

    total = jnp.float32(0.0)

    if main:
        rows = main // _LANE                      # multiple of 8 by construction
        tile_rows = min(rows, _TILE_ROWS_MAX)     # both multiples of 8
        num_tiles = pl.cdiv(rows, tile_rows)
        needs_mask = (rows % tile_rows) != 0
        itemsize = predictions.dtype.itemsize

        p2d = p_flat[:main].reshape(rows, _LANE)
        t2d = t_flat[:main].reshape(rows, _LANE)

        partials = pl.pallas_call(
            _make_partial_kernel(tile_rows, rows, needs_mask),
            out_shape=jax.ShapeDtypeStruct((num_tiles * _SUB, _LANE), jnp.float32),
            grid=(num_tiles,),
            in_specs=[
                pl.BlockSpec((tile_rows, _LANE), lambda i: (i, 0)),
                pl.BlockSpec((tile_rows, _LANE), lambda i: (i, 0)),
            ],
            out_specs=pl.BlockSpec((_SUB, _LANE), lambda i: (i, 0)),
            compiler_params=pltpu.CompilerParams(
                dimension_semantics=("parallel",),  # megacore-shardable on v7x
            ),
            cost_estimate=pl.CostEstimate(
                flops=3 * main,
                transcendentals=0,
                bytes_accessed=2 * main * itemsize + num_tiles * _SUB * _LANE * 4,
            ),
        )(p2d, t2d)

        # Tiny final tree-sum over the f32 partials (num_tiles*8*128 elements).
        total = total + jnp.sum(partials)

    if main != n_elem:
        # Ragged tail (< 1024 elements): plain JAX, avoids padding/copying the
        # full inputs in HBM.
        tp = p_flat[main:].astype(jnp.float32)
        tt = t_flat[main:].astype(jnp.float32)
        total = total + jnp.sum((tp - tt) ** 2)

    return (total / jnp.float32(n_elem)).astype(jnp.float32)


if __name__ == "__main__":
    key = jax.random.PRNGKey(0)
    kp, kt = jax.random.split(key)
    # Small NCHW shapes consistent with the module's tensor interface.
    predictions = jax.random.normal(kp, (2, 4, 16, 16), dtype=jnp.float32)
    targets = jax.random.normal(kt, (2, 4, 16, 16), dtype=jnp.float32)

    loss = loss_forward(predictions, targets, parameters={})
    jax.block_until_ready(loss)

    # Sanity check against pure-JAX reference.
    ref = jnp.mean((predictions - targets) ** 2)
    assert jnp.allclose(loss, ref, rtol=1e-5, atol=1e-6), (loss, ref)

    print("KERNEL_OK")
</pallas_src>

<mosaic_0001>
module attributes {stable_mosaic.version = 11 : i64} {
  func.func @kernel(%arg0: i32, %arg1: memref<16x128xf32, #tpu.memory_space<vmem>>, %arg2: memref<16x128xf32, #tpu.memory_space<vmem>>, %arg3: memref<8x128xf32, #tpu.memory_space<vmem>>) attributes {dimension_semantics = [#tpu.dimension_semantics<parallel>], iteration_bounds = array<i64: 1>, scalar_prefetch = 0 : i64, scratch_operands = 0 : i64, tpu.core_type = #tpu.core_type<tc>, window_params = [{transform_indices = @transform_0, window_bounds = array<i64: 16, 128>}, {transform_indices = @transform_1, window_bounds = array<i64: 16, 128>}, {transform_indices = @transform_2, window_bounds = array<i64: 8, 128>}]} {
    %c0 = arith.constant 0 : index
    %c0_0 = arith.constant 0 : index
    %0 = vector.load %arg1[%c0, %c0_0] : memref<16x128xf32, #tpu.memory_space<vmem>>, vector<16x128xf32>
    %c0_1 = arith.constant 0 : index
    %c0_2 = arith.constant 0 : index
    %1 = vector.load %arg2[%c0_1, %c0_2] : memref<16x128xf32, #tpu.memory_space<vmem>>, vector<16x128xf32>
    %2 = arith.subf %0, %1 : vector<16x128xf32>
    %3 = arith.mulf %2, %2 : vector<16x128xf32>
    %4 = vector.shape_cast %3 : vector<16x128xf32> to vector<2x8x128xf32>
    %cst = arith.constant dense<0.000000e+00> : vector<8x128xf32>
    %5 = vector.multi_reduction <add>, %4, %cst [0] : vector<2x8x128xf32> to vector<8x128xf32>
    %c0_3 = arith.constant 0 : index
    %c0_4 = arith.constant 0 : index
    %6 = vector.load %arg3[%c0_3, %c0_4] : memref<8x128xf32, #tpu.memory_space<vmem>>, vector<8x128xf32>
    tpu.vector_store %arg3[%c0_3, %c0_4], %5 {strides = array<i32>} : memref<8x128xf32, #tpu.memory_space<vmem>>, vector<8x128xf32>,
    return
  }
  func.func @transform_0(%arg0: i32) -> (i32, i32) {
    %c0_i32 = arith.constant 0 : i32
    %c0_i32_0 = arith.constant 0 : i32
    return %arg0, %c0_i32 : i32, i32
  }
  func.func @transform_1(%arg0: i32) -> (i32, i32) {
    %c0_i32 = arith.constant 0 : i32
    %c0_i32_0 = arith.constant 0 : i32
    return %arg0, %c0_i32 : i32, i32
  }
  func.func @transform_2(%arg0: i32) -> (i32, i32) {
    %c0_i32 = arith.constant 0 : i32
    %c0_i32_0 = arith.constant 0 : i32
    return %arg0, %c0_i32 : i32, i32
  }
}

</mosaic_0001>

<llo_original>
// kernel: tpu_custom_call.1
$region0: #{tpu_custom_call.1}
  #allocation0 [shape = 'u32[]', space=smem, size = 0x4, offset = 0x4, fixed_abs, tag = 'smem constant byte address 0x4 - core index']
  #allocation1 [shape = 'u32[72,128]{1,0:T(1,128)}', space=vmem, size = 0x9000, scoped, tag = 'internal scratch']
  %s0 = inlined_call_operand.hbm [shape: f32[16,128], index: 0, kind: input, shape index: {}]
  %s1 = inlined_call_operand.hbm [shape: f32[16,128], index: 1, kind: input, shape index: {}]
  %s2 = inlined_call_operand.hbm [shape: f32[8,128], index: 2, kind: output, shape index: {}]
  %s3 = sld [smem:[#allocation0]]
  $region26: #{tpu_custom_call.1} parent=0
    _
  %s5 = ssub.s32 1, %s3
  %s6 = scalar_select 0, %s5, %s3
  $region1: #{tpu_custom_call.1} parent=0
    #allocation2 [shape = 'u8[8192]{0}', space=vmem, size = 0x2000, scoped, tag = 'input window, operand 0, single buffered']
    #allocation3 [shape = 's32[1]{0}', space=sflag, size = 0x4, scoped, tag = 'scoped memory for tpu_custom_call.1']
    #allocation4 [shape = 's32[1]{0}', space=sflag, size = 0x4, scoped, tag = 'scoped memory for tpu_custom_call.1']
    #allocation5 [shape = 'u8[8192]{0}', space=vmem, size = 0x2000, scoped, tag = 'input window, operand 1, single buffered']
    #allocation6 [shape = 's32[1]{0}', space=sflag, size = 0x4, scoped, tag = 'scoped memory for tpu_custom_call.1']
    #allocation7 [shape = 'u8[4096]{0}', space=vmem, size = 0x1000, scoped, tag = 'output window, operand 0, single buffered']
    %7 = vsyncpa [#allocation3], 0
    %8 = vsyncpa [#allocation6], 0
    %9 = vsyncpa [#allocation4], 0
    // Predicated region
    $region2: #{tpu_custom_call.1} parent=1 // pred_check
      _
    $region3: #{tpu_custom_call.1} parent=1 // pred_check_branch
      %11 = sbr.rel (0) target = $region5
    $region4: #{tpu_custom_call.1} parent=1 // pred_region
      %13 = vsyncadd [#allocation3], 0
      %s14 = sshll.u32 %s0, 4
      %s15 = int_to_ptr.hbm [resolvable:$true] %s14
      %s16 = sshll.u32 [#allocation2], 4
      %s17 = int_to_ptr.vmem [resolvable:$true] %s16
      %22 = dma.hbm_to_vmem [thread:$0]  %s15, 256, %s17, [#allocation3], 128, 128, 8
    $region5: #{tpu_custom_call.1} parent=1 // pred_fallthru
      _
    // Predicated region
    $region6: #{tpu_custom_call.1} parent=1 // pred_check
      _
    $region7: #{tpu_custom_call.1} parent=1 // pred_check_branch
      %24 = sbr.rel (0) target = $region9
    $region8: #{tpu_custom_call.1} parent=1 // pred_region
      %26 = vsyncadd [#allocation6], 0
      %s27 = sshll.u32 %s1, 4
      %s28 = int_to_ptr.hbm [resolvable:$true] %s27
      %s29 = sshll.u32 [#allocation5], 4
      %s30 = int_to_ptr.vmem [resolvable:$true] %s29
      %35 = dma.hbm_to_vmem [thread:$0]  %s28, 256, %s30, [#allocation6], 128, 128, 8
    $region9: #{tpu_custom_call.1} parent=1 // pred_fallthru
      _
    // Predicated region
    $region10: #{tpu_custom_call.1} parent=1 // pred_check
      _
    $region11: #{tpu_custom_call.1} parent=1 // pred_check_branch
      %37 = sbr.rel (0) target = $region13
    $region12: #{tpu_custom_call.1} parent=1 // pred_region
      %39 = dma.done [#allocation3], 256
    $region13: #{tpu_custom_call.1} parent=1 // pred_fallthru
      _
    // Predicated region
    $region14: #{tpu_custom_call.1} parent=1 // pred_check
      _
    $region15: #{tpu_custom_call.1} parent=1 // pred_check_branch
      %41 = sbr.rel (0) target = $region17
    $region16: #{tpu_custom_call.1} parent=1 // pred_region
      %43 = dma.done [#allocation6], 256
    $region17: #{tpu_custom_call.1} parent=1 // pred_fallthru
      _
    %v44 = vld [vmem:[#allocation2] sm:$0xff]
    %v45 = vld [vmem:[#allocation2 + $0x8] sm:$0xff]
    %v46 = vld [vmem:[#allocation5] sm:$0xff]
    %v47 = vld [vmem:[#allocation5 + $0x8] sm:$0xff]
    %v48 = vsub.f32 %v44, %v46
    %v49 = vsub.f32 %v45, %v47
    %v50 = vmul.f32 %v48, %v48
    %v51 = vmul.f32 %v49, %v49
    %v52 = vadd.f32 %v50, %v51
    %53 = vst [vmem:[#allocation7] sm:$0xff] %v52
    // Predicated region
    $region18: #{tpu_custom_call.1} parent=1 // pred_check
      _
    $region19: #{tpu_custom_call.1} parent=1 // pred_check_branch
      %55 = sbr.rel (0) target = $region21
    $region20: #{tpu_custom_call.1} parent=1 // pred_region
      %57 = vsyncadd [#allocation4], 0
      %s59 = sshll.u32 [#allocation7], 4
      %s60 = int_to_ptr.vmem [resolvable:$true] %s59
      %s61 = sshll.u32 %s2, 4
      %s62 = int_to_ptr.hbm [resolvable:$true] %s61
      %64 = dma.vmem_to_hbm [thread:$0]  %s60, 128, %s62, [#allocation4]
    $region21: #{tpu_custom_call.1} parent=1 // pred_fallthru
      _
    // Predicated region
    $region22: #{tpu_custom_call.1} parent=1 // pred_check
      _
    $region23: #{tpu_custom_call.1} parent=1 // pred_check_branch
      %66 = sbr.rel (0) target = $region25
    $region24: #{tpu_custom_call.1} parent=1 // pred_region
      %68 = dma.done [#allocation4], 128
    $region25: #{tpu_custom_call.1} parent=1 // pred_fallthru
      _
    %69 = vsyncpa [#allocation3], 1
    %70 = vsyncpa [#allocation6], 1
    %71 = vsyncpa [#allocation4], 1

</llo_original>
